<compile_context>
chip_gen: v6e
topology: v6e:2x2x1
jax: 0.10.0
libtpu: 0.0.40
codegen_flags: <defaults>
</compile_context>

<pallas_src>
import functools

import jax
import jax.numpy as jnp
from jax.experimental import pallas as pl
from jax.experimental.pallas import tpu as pltpu

_LANES = 128
_SUBLANES = 8
_CHAINS = 4                      # independent partial-sum accumulators per core
_MIN_ROWS = _CHAINS * _SUBLANES  # 32: tile_rows granularity


def _mape_kernel(p_ref, t_ref, out_ref, *, tiles_per_core, tile_rows, rows_valid):
    c = pl.program_id(0)   # TensorCore split (parallel)
    i = pl.program_id(1)   # row-tile sweep (arbitrary, accumulating)

    @pl.when(i == 0)
    def _():
        out_ref[...] = jnp.zeros_like(out_ref)

    # Upcast to f32 in-kernel (HBM traffic stays native dtype; v5e VPU has no bf16).
    p = p_ref[...].astype(jnp.float32)          # (tile_rows, 128)
    t = t_ref[...].astype(jnp.float32)

    abs_t = jnp.abs(t)
    abs_diff = jnp.abs(t - p)

    # divide_no_nan(1, |t|): EUP approx reciprocal + one Newton-Raphson step
    # (~f32 accuracy).  |t| == 0 (or 1/|t| overflow) yields inf/nan in `inv`
    # and is zeroed by the isfinite/nonzero select below.
    inv0 = pl.reciprocal(abs_t, approx=True)
    inv = inv0 * (2.0 - abs_t * inv0)

    # Mask rows beyond the true row count: the last (partial) block and any
    # clamped duplicate block on the second core must not contribute.
    block_row0 = (c * tiles_per_core + i) * tile_rows
    row_ids = block_row0 + jax.lax.broadcasted_iota(jnp.int32, p.shape, 0)
    valid = (row_ids < rows_valid) & (abs_t > 0.0) & jnp.isfinite(inv)

    pe = jnp.where(valid, abs_diff * inv, 0.0)

    # Fold the tile into 4 independent (8,128) partial accumulators: summing
    # over the leading axis of the (tile_rows/32, 4, 8, 128) view is pure vreg
    # adds (VALU, no relayout); the cross-lane reduce happens once, in XLA.
    partial = pe.reshape(tile_rows // _MIN_ROWS, _CHAINS, _SUBLANES, _LANES).sum(axis=0)
    out_ref[...] += partial[None]


def mape_loss(predictions, targets, *, tile_rows=4096):
    """100 * mean(|t - p| * divide_no_nan(1, |t|)) over all elements."""
    assert predictions.shape == targets.shape
    count = int(predictions.size)
    assert count > 0

    p_flat = predictions.reshape(-1)
    t_flat = targets.reshape(-1)

    min_elems = _MIN_ROWS * _LANES  # 4096
    if count < min_elems:
        padded_count = min_elems                      # tiny input: one 32x128 slab
    else:
        padded_count = -(-count // _LANES) * _LANES   # minimal lane alignment

    pad = padded_count - count
    if pad:
        # Zero padding: |t| == 0 elements contribute 0 (divide_no_nan semantics).
        # This copy only triggers when the element count is not lane-aligned.
        p_flat = jnp.pad(p_flat, (0, pad))
        t_flat = jnp.pad(t_flat, (0, pad))

    rows = padded_count // _LANES                     # >= 32
    p2 = p_flat.reshape(rows, _LANES)
    t2 = t_flat.reshape(rows, _LANES)

    # Tile rows: multiple of 32 (so the 4-way accumulator split divides evenly),
    # clamped to the data size.
    tile_rows = max(_MIN_ROWS, (tile_rows // _MIN_ROWS) * _MIN_ROWS)
    tile_rows = min(tile_rows, (rows // _MIN_ROWS) * _MIN_ROWS)

    num_blocks = -(-rows // tile_rows)
    tiles_per_core = -(-num_blocks // 2)              # split row range across 2 TCs

    def in_map(c, i):
        # Clamp so the DMA start never lands fully out of bounds (odd num_blocks
        # -> the second core's last logical block is a duplicate, fully masked
        # in-kernel via the row-index check).
        b = jnp.minimum(c * tiles_per_core + i, num_blocks - 1)
        return (b, 0)

    kernel = functools.partial(
        _mape_kernel,
        tiles_per_core=tiles_per_core,
        tile_rows=tile_rows,
        rows_valid=rows,
    )

    bytes_in = (jnp.dtype(predictions.dtype).itemsize
                + jnp.dtype(targets.dtype).itemsize) * padded_count
    cost = pl.CostEstimate(
        flops=8 * padded_count,
        transcendentals=padded_count,
        bytes_accessed=bytes_in + 2 * _CHAINS * _SUBLANES * _LANES * 4,
    )

    partials = pl.pallas_call(
        kernel,
        out_shape=jax.ShapeDtypeStruct((2, _CHAINS, _SUBLANES, _LANES), jnp.float32),
        grid_spec=pltpu.PrefetchScalarGridSpec(
            num_scalar_prefetch=0,
            grid=(2, tiles_per_core),
            in_specs=[
                pl.BlockSpec((tile_rows, _LANES), in_map),  # predictions
                pl.BlockSpec((tile_rows, _LANES), in_map),  # targets
            ],
            out_specs=pl.BlockSpec((1, _CHAINS, _SUBLANES, _LANES),
                                   lambda c, i: (c, 0, 0, 0)),
        ),
        compiler_params=pltpu.CompilerParams(
            dimension_semantics=("parallel", "arbitrary"),
        ),
        cost_estimate=cost,
    )(p2, t2)

    # Tiny final cross-lane reduction (2*4*8*128 f32) + scaling in XLA.
    return jnp.sum(partials) * (100.0 / count)


def _reference(predictions, targets):
    abs_t = jnp.abs(targets)
    nonzero = abs_t > 0.0
    pe = jnp.where(nonzero,
                   jnp.abs(targets - predictions) / jnp.where(nonzero, abs_t, 1.0),
                   0.0)
    return 100.0 * jnp.mean(pe)


if __name__ == "__main__":
    key = jax.random.PRNGKey(0)
    k1, k2, k3, k4 = jax.random.split(key, 4)

    # Case 1: small, non-lane-aligned forecast tensor (exercises pad + tiny-input path).
    B, S, H = 2, 7, 33
    p1 = jax.random.normal(k1, (B, S, H), dtype=jnp.float32)
    t1 = jax.random.normal(k2, (B, S, H), dtype=jnp.float32)
    t1 = t1.at[0, 0, :4].set(0.0)  # exercise the divide_no_nan (|t| == 0) path
    out1 = jax.block_until_ready(mape_loss(p1, t1))
    ref1 = _reference(p1, t1)
    assert jnp.allclose(out1, ref1, rtol=1e-5, atol=1e-5), (out1, ref1)

    # Case 2: lane-aligned tensor with several grid steps per core (exercises
    # multi-tile accumulation, the odd-block clamp and row-tail masking).
    p2 = jax.random.normal(k3, (4, 24, 128), dtype=jnp.float32)
    t2 = jax.random.normal(k4, (4, 24, 128), dtype=jnp.float32)
    t2 = t2.at[1, 3, :16].set(0.0)
    out2 = jax.block_until_ready(mape_loss(p2, t2, tile_rows=32))
    ref2 = _reference(p2, t2)
    assert jnp.allclose(out2, ref2, rtol=1e-5, atol=1e-5), (out2, ref2)

    print("KERNEL_OK")
</pallas_src>

<mosaic_0001>
module attributes {stable_mosaic.version = 11 : i64} {
  func.func @_mape_kernel(%arg0: i32, %arg1: i32, %arg2: memref<32x128xf32, #tpu.memory_space<vmem>>, %arg3: memref<32x128xf32, #tpu.memory_space<vmem>>, %arg4: memref<1x4x8x128xf32, #tpu.memory_space<vmem>>) attributes {dimension_semantics = [#tpu.dimension_semantics<parallel>, #tpu.dimension_semantics<arbitrary>], iteration_bounds = array<i64: 2, 1>, scalar_prefetch = 0 : i64, scratch_operands = 0 : i64, tpu.core_type = #tpu.core_type<tc>, window_params = [{transform_indices = @transform_0, window_bounds = array<i64: 32, 128>}, {transform_indices = @transform_1, window_bounds = array<i64: 32, 128>}, {transform_indices = @transform_2, window_bounds = array<i64: 1, 4, 8, 128>}]} {
    %c0_i32 = arith.constant 0 : i32
    %0 = arith.cmpi eq, %arg1, %c0_i32 : i32
    %1 = arith.extui %0 : i1 to i32
    %c0_i32_0 = arith.constant 0 : i32
    %2 = arith.cmpi ne, %1, %c0_i32_0 : i32
    scf.if %2 {
      %cst_17 = arith.constant 0.000000e+00 : f32
      %36 = vector.broadcast %cst_17 : f32 to vector<1x4x8x128xf32>
      %c0_18 = arith.constant 0 : index
      %c0_19 = arith.constant 0 : index
      %c0_20 = arith.constant 0 : index
      %c0_21 = arith.constant 0 : index
      %37 = vector.load %arg4[%c0_18, %c0_19, %c0_20, %c0_21] : memref<1x4x8x128xf32, #tpu.memory_space<vmem>>, vector<1x4x8x128xf32>
      tpu.vector_store %arg4[%c0_18, %c0_19, %c0_20, %c0_21], %36 {strides = array<i32>} : memref<1x4x8x128xf32, #tpu.memory_space<vmem>>, vector<1x4x8x128xf32>,
    } else {
    }
    %c0 = arith.constant 0 : index
    %c0_1 = arith.constant 0 : index
    %3 = vector.load %arg2[%c0, %c0_1] : memref<32x128xf32, #tpu.memory_space<vmem>>, vector<32x128xf32>
    %c0_2 = arith.constant 0 : index
    %c0_3 = arith.constant 0 : index
    %4 = vector.load %arg3[%c0_2, %c0_3] : memref<32x128xf32, #tpu.memory_space<vmem>>, vector<32x128xf32>
    %5 = math.absf %4 : vector<32x128xf32>
    %6 = arith.subf %4, %3 : vector<32x128xf32>
    %7 = math.absf %6 : vector<32x128xf32>
    %8 = tpu.reciprocal %5 {approx = true} : vector<32x128xf32> -> vector<32x128xf32>
    %9 = arith.mulf %5, %8 : vector<32x128xf32>
    %cst = arith.constant 2.000000e+00 : f32
    %10 = vector.broadcast %cst : f32 to vector<32x128xf32>
    %11 = arith.subf %10, %9 : vector<32x128xf32>
    %12 = arith.mulf %8, %11 : vector<32x128xf32>
    %c1_i32 = arith.constant 1 : i32
    %13 = arith.muli %arg0, %c1_i32 : i32
    %14 = arith.addi %13, %arg1 : i32
    %c32_i32 = arith.constant 32 : i32
    %15 = arith.muli %14, %c32_i32 : i32
    %16 = tpu.iota {dimensions = array<i32: 0>} : vector<32x128xi32>
    %17 = vector.broadcast %15 : i32 to vector<32x128xi32>
    %18 = arith.addi %17, %16 : vector<32x128xi32>
    %c32_i32_4 = arith.constant 32 : i32
    %19 = vector.broadcast %c32_i32_4 : i32 to vector<32x128xi32>
    %20 = arith.cmpi slt, %18, %19 : vector<32x128xi32>
    %cst_5 = arith.constant 0.000000e+00 : f32
    %21 = vector.broadcast %cst_5 : f32 to vector<32x128xf32>
    %22 = arith.cmpf ogt, %5, %21 : vector<32x128xf32>
    %23 = arith.andi %20, %22 : vector<32x128xi1>
    %24 = tpu.weird %12 : vector<32x128xf32> -> vector<32x128xi1>
    %cst_6 = arith.constant dense<true> : vector<32x128xi1>
    %25 = arith.xori %24, %cst_6 : vector<32x128xi1>
    %26 = arith.andi %23, %25 : vector<32x128xi1>
    %27 = arith.mulf %7, %12 : vector<32x128xf32>
    %cst_7 = arith.constant 0.000000e+00 : f32
    %28 = vector.broadcast %cst_7 : f32 to vector<32x128xf32>
    %29 = arith.select %26, %27, %28 : vector<32x128xi1>, vector<32x128xf32>
    %30 = vector.shape_cast %29 : vector<32x128xf32> to vector<1x4x8x128xf32>
    %cst_8 = arith.constant dense<0.000000e+00> : vector<4x8x128xf32>
    %31 = vector.multi_reduction <add>, %30, %cst_8 [0] : vector<1x4x8x128xf32> to vector<4x8x128xf32>
    %c0_9 = arith.constant 0 : index
    %c0_10 = arith.constant 0 : index
    %c0_11 = arith.constant 0 : index
    %c0_12 = arith.constant 0 : index
    %32 = vector.load %arg4[%c0_9, %c0_10, %c0_11, %c0_12] : memref<1x4x8x128xf32, #tpu.memory_space<vmem>>, vector<1x4x8x128xf32>
    %33 = vector.shape_cast %31 : vector<4x8x128xf32> to vector<1x4x8x128xf32>
    %34 = arith.addf %32, %33 : vector<1x4x8x128xf32>
    %c0_13 = arith.constant 0 : index
    %c0_14 = arith.constant 0 : index
    %c0_15 = arith.constant 0 : index
    %c0_16 = arith.constant 0 : index
    %35 = vector.load %arg4[%c0_13, %c0_14, %c0_15, %c0_16] : memref<1x4x8x128xf32, #tpu.memory_space<vmem>>, vector<1x4x8x128xf32>
    tpu.vector_store %arg4[%c0_13, %c0_14, %c0_15, %c0_16], %34 {strides = array<i32>} : memref<1x4x8x128xf32, #tpu.memory_space<vmem>>, vector<1x4x8x128xf32>,
    return
  }
  func.func @transform_0(%arg0: i32, %arg1: i32) -> (i32, i32) {
    %c1_i32 = arith.constant 1 : i32
    %0 = arith.muli %arg0, %c1_i32 : i32
    %1 = arith.addi %0, %arg1 : i32
    %c0_i32 = arith.constant 0 : i32
    %2 = arith.minsi %1, %c0_i32 : i32
    %c0_i32_0 = arith.constant 0 : i32
    %c0_i32_1 = arith.constant 0 : i32
    return %2, %c0_i32_0 : i32, i32
  }
  func.func @transform_1(%arg0: i32, %arg1: i32) -> (i32, i32) {
    %c1_i32 = arith.constant 1 : i32
    %0 = arith.muli %arg0, %c1_i32 : i32
    %1 = arith.addi %0, %arg1 : i32
    %c0_i32 = arith.constant 0 : i32
    %2 = arith.minsi %1, %c0_i32 : i32
    %c0_i32_0 = arith.constant 0 : i32
    %c0_i32_1 = arith.constant 0 : i32
    return %2, %c0_i32_0 : i32, i32
  }
  func.func @transform_2(%arg0: i32, %arg1: i32) -> (i32, i32, i32, i32) {
    %c0_i32 = arith.constant 0 : i32
    %c0_i32_0 = arith.constant 0 : i32
    %c0_i32_1 = arith.constant 0 : i32
    %c0_i32_2 = arith.constant 0 : i32
    return %arg0, %c0_i32, %c0_i32_0, %c0_i32_1 : i32, i32, i32, i32
  }
}

</mosaic_0001>

<llo_original>
// kernel: tpu_custom_call.1
$region0: #{tpu_custom_call.1}
  #allocation0 [shape = 'u32[]', space=smem, size = 0x4, offset = 0x4, fixed_abs, tag = 'smem constant byte address 0x4 - core index']
  #allocation1 [shape = 'u32[144,128]{1,0:T(1,128)}', space=vmem, size = 0x12000, scoped, tag = 'internal scratch']
  %s0 = inlined_call_operand.hbm [shape: f32[32,128], index: 0, kind: input, shape index: {}]
  %s1 = inlined_call_operand.hbm [shape: f32[32,128], index: 1, kind: input, shape index: {}]
  %s2 = inlined_call_operand.hbm [shape: f32[2,4,8,128], index: 2, kind: output, shape index: {}]
  %s3 = sld [smem:[#allocation0]]
  $region53: #{tpu_custom_call.1} parent=0
    _
  %s5 = ssub.s32 1, %s3
  %s6 = scalar_select 0, %s5, %s3
  $region1: #{tpu_custom_call.1} parent=0
    #allocation2 [shape = 'u8[32768]{0}', space=vmem, size = 0x8000, scoped, tag = 'input window, operand 0']
    #allocation3 [shape = 's32[2]{0}', space=sflag, size = 0x8, scoped, tag = 'scoped memory for tpu_custom_call.1']
    #allocation4 [shape = 's32[2]{0}', space=sflag, size = 0x8, scoped, tag = 'scoped memory for tpu_custom_call.1']
    #allocation5 [shape = 'u8[32768]{0}', space=vmem, size = 0x8000, scoped, tag = 'input window, operand 1']
    #allocation6 [shape = 's32[2]{0}', space=sflag, size = 0x8, scoped, tag = 'scoped memory for tpu_custom_call.1']
    #allocation7 [shape = 'u8[32768]{0}', space=vmem, size = 0x8000, scoped, tag = 'output window, operand 0']
    %7 = vsyncpa [#allocation3], 0
    %s8 = scalar_lea.sflag [#allocation3], 1
    %9 = vsyncpa %s8, 0
    %10 = vsyncpa [#allocation6], 0
    %s11 = scalar_lea.sflag [#allocation6], 1
    %12 = vsyncpa %s11, 0
    %13 = vsyncpa [#allocation4], 0
    %s14 = scalar_lea.sflag [#allocation4], 1
    %15 = vsyncpa %s14, 0
    loop: start=0, step=1, limit=4
    $region2: #{tpu_custom_call.1} parent=1 // loop_pre_header
      _
    $region3: #{tpu_custom_call.1} parent=1 // loop_header
      %s17 = sphi 0, %s21
      %p18 = scmp.ge.s32.totalorder %s17, 4
      %s24 = sphi 0, %s36
      %s25 = sphi 0, %s32
      %s26 = sphi 0, %s24
      %s27 = sphi 0, %s25
      %s28 = sphi 0, %s26
      %s29 = sphi 0, %s27
      %s45 = sphi 0, %s47
      %s48 = sphi 0, %s45
      %s49 = sphi 0, %s48
      %s65 = sphi 0, %s49
      %s77 = sphi 0, %s79
      %s80 = sphi 0, %s77
      %s81 = sphi 0, %s80
      %s97 = sphi 0, %s81
      %s103 = sphi 0, %s105
      %s106 = sphi 0, %s103
      %s107 = sphi 0, %s106
      %s123 = sphi 0, %s107
    $region4: #{tpu_custom_call.1} parent=1 // loop_header_branch
      %20 = sbr.rel (%p18) target = $region8
    $region5: #{tpu_custom_call.1} parent=1 // loop_body
      %s22 = ssub.s32 %s17, 1
      %s23 = ssub.s32 %s17, 2
      %s30 = sadd.s32 1, %s25
      %p31 = scmp.ge.s32.totalorder %s30, 1
      %s32 = scalar_select %p31, 0, %s30
      %s33 = sadd.s32 1, %s24
      %s34 = scalar_select %p31, %s33, %s24
      %p35 = scmp.ge.s32.totalorder %s34, 2
      %s36 = scalar_select %p35, 0, %s34
      %s37 = sadd.s32 %s24, %s25
      %p38 = scmp.lt.s32.totalorder %s37, 0
      %s39 = scalar_select %p38, %s37, 0
      %s40 = sadd.s32 %s36, %s32
      %p41 = scmp.lt.s32.totalorder %s40, 0
      %s42 = scalar_select %p41, %s40, 0
      %s43 = ssub.s32 %s39, %s42
      %p44 = scmp.eq.s32.totalorder %s43, 0
      %s46 = sadd.s32 %s45, 1
      %s47 = scalar_select %p44, %s45, %s46
      %p50 = pneg %p44
      %p51 = scmp.eq.s32.totalorder %s17, 1
      %p52 = por %p50, %p51
      %p53 = scmp.ne.s32.totalorder %s45, %s48
      %p54 = scmp.eq.s32.totalorder %s17, 0
      %p55 = por %p53, %p54
      %p56 = scmp.ne.s32.totalorder %s45, %s48
      %p57 = scmp.eq.s32.totalorder %s22, 1
      %p58 = por %p56, %p57
      %p59 = scmp.ne.s32.totalorder %s48, %s49
      %p60 = scmp.eq.s32.totalorder %s22, 0
      %p61 = por %p59, %p60
      %p62 = scmp.ne.s32.totalorder %s48, %s49
      %p63 = scmp.eq.s32.totalorder %s23, 1
      %p64 = por %p62, %p63
      %p66 = scmp.ne.s32.totalorder %s49, %s65
      %p67 = scmp.eq.s32.totalorder %s23, 0
      %p68 = por %p66, %p67
      %s69 = sadd.s32 %s24, %s25
      %p70 = scmp.lt.s32.totalorder %s69, 0
      %s71 = scalar_select %p70, %s69, 0
      %s72 = sadd.s32 %s36, %s32
      %p73 = scmp.lt.s32.totalorder %s72, 0
      %s74 = scalar_select %p73, %s72, 0
      %s75 = ssub.s32 %s71, %s74
      %p76 = scmp.eq.s32.totalorder %s75, 0
      %s78 = sadd.s32 %s77, 1
      %s79 = scalar_select %p76, %s77, %s78
      %p82 = pneg %p76
      %p83 = scmp.eq.s32.totalorder %s17, 1
      %p84 = por %p82, %p83
      %p85 = scmp.ne.s32.totalorder %s77, %s80
      %p86 = scmp.eq.s32.totalorder %s17, 0
      %p87 = por %p85, %p86
      %p88 = scmp.ne.s32.totalorder %s77, %s80
      %p89 = scmp.eq.s32.totalorder %s22, 1
      %p90 = por %p88, %p89
      %p91 = scmp.ne.s32.totalorder %s80, %s81
      %p92 = scmp.eq.s32.totalorder %s22, 0
      %p93 = por %p91, %p92
      %p94 = scmp.ne.s32.totalorder %s80, %s81
      %p95 = scmp.eq.s32.totalorder %s23, 1
      %p96 = por %p94, %p95
      %p98 = scmp.ne.s32.totalorder %s81, %s97
      %p99 = scmp.eq.s32.totalorder %s23, 0
      %p100 = por %p98, %p99
      %s101 = ssub.s32 %s24, %s36
      %p102 = scmp.eq.s32.totalorder %s101, 0
      %s104 = sadd.s32 %s103, 1
      %s105 = scalar_select %p102, %s103, %s104
      %p108 = pneg %p102
      %p109 = scmp.eq.s32.totalorder %s17, 1
      %p110 = por %p108, %p109
      %p111 = scmp.ne.s32.totalorder %s103, %s106
      %p112 = scmp.eq.s32.totalorder %s17, 0
      %p113 = por %p111, %p112
      %p114 = scmp.ne.s32.totalorder %s103, %s106
      %p115 = scmp.eq.s32.totalorder %s22, 1
      %p116 = por %p114, %p115
      %p117 = scmp.ne.s32.totalorder %s106, %s107
      %p118 = scmp.eq.s32.totalorder %s22, 0
      %p119 = por %p117, %p118
      %p120 = scmp.ne.s32.totalorder %s106, %s107
      %p121 = scmp.eq.s32.totalorder %s23, 1
      %p122 = por %p120, %p121
      %p124 = scmp.ne.s32.totalorder %s107, %s123
      %p125 = scmp.eq.s32.totalorder %s23, 0
      %p126 = por %p124, %p125
      %p127 = scmp.le.s32.totalorder 1, %s17
      %p128 = scmp.lt.s32.totalorder %s17, 3
      %p129 = pnand %p127, %p128
      %p130 = pneg %p129
      // Predicated region
      $region9: #{tpu_custom_call.1} parent=5 // pred_check
        _
      $region10: #{tpu_custom_call.1} parent=5 // pred_check_branch
        %132 = sbr.rel (%p129) target = $region12
      $region11: #{tpu_custom_call.1} parent=5 // pred_region
        %s133 = ssub.s32 %s17, 1
      $region12: #{tpu_custom_call.1} parent=5 // pred_fallthru
        _
      %p134 = scmp.lt.s32.totalorder %s17, 2
      // Predicated region
      $region13: #{tpu_custom_call.1} parent=5 // pred_check
        %p135 = pneg %p134
      $region14: #{tpu_custom_call.1} parent=5 // pred_check_branch
        %137 = sbr.rel (%p135) target = $region16
      $region15: #{tpu_custom_call.1} parent=5 // pred_region
        // Predicated region
        $region17: #{tpu_custom_call.1} parent=15 // pred_check
          %p138 = pneg %p55
        $region18: #{tpu_custom_call.1} parent=15 // pred_check_branch
          %140 = sbr.rel (%p138) target = $region20
        $region19: #{tpu_custom_call.1} parent=15 // pred_region
          %s141 = sand.u32 %s45, 1
          %s142 = scalar_lea.sflag [#allocation3], %s141
          %s143 = sand.u32 %s45, 1
          %s144 = smul.addr %s143, 32
          %s145 = scalar_lea.vmem [#allocation2], %s144
          %s146 = sadd.s32 %s24, %s25
          %p147 = scmp.lt.s32.totalorder %s146, 0
          %s148 = scalar_select %p147, %s146, 0
          %s149 = smul.u32 4, %s148
          %s151 = ssub.s32 512, 512
          %152 = vsyncadd %s142, %s151
          %s153 = smul.addr %s149, 128
          %s154 = scalar_lea.hbm %s0, %s153
          %s155 = sshll.u32 %s145, 4
          %s156 = int_to_ptr.vmem [resolvable:$true] %s155
          %161 = dma.hbm_to_vmem [thread:$0]  %s154, 512, %s156, %s142, 128, 128, 8
        $region20: #{tpu_custom_call.1} parent=15 // pred_fallthru
          _
        // Predicated region
        $region21: #{tpu_custom_call.1} parent=15 // pred_check
          %p162 = pneg %p87
        $region22: #{tpu_custom_call.1} parent=15 // pred_check_branch
          %164 = sbr.rel (%p162) target = $region24
        $region23: #{tpu_custom_call.1} parent=15 // pred_region
          %s165 = sand.u32 %s77, 1
          %s166 = scalar_lea.sflag [#allocation6], %s165
          %s167 = sand.u32 %s77, 1
          %s168 = smul.addr %s167, 32
          %s169 = scalar_lea.vmem [#allocation5], %s168
          %s170 = sadd.s32 %s24, %s25
          %p171 = scmp.lt.s32.totalorder %s170, 0
          %s172 = scalar_select %p171, %s170, 0
          %s173 = smul.u32 4, %s172
          %s175 = ssub.s32 512, 512
          %176 = vsyncadd %s166, %s175
          %s177 = smul.addr %s173, 128
          %s178 = scalar_lea.hbm %s1, %s177
          %s179 = sshll.u32 %s169, 4
          %s180 = int_to_ptr.vmem [resolvable:$true] %s179
          %185 = dma.hbm_to_vmem [thread:$0]  %s178, 512, %s180, %s166, 128, 128, 8
        $region24: #{tpu_custom_call.1} parent=15 // pred_fallthru
          _
      $region16: #{tpu_custom_call.1} parent=5 // pred_fallthru
        _
      %p186 = scmp.le.s32.totalorder 1, %s17
      %p187 = scmp.lt.s32.totalorder %s17, 3
      %p188 = pnand %p186, %p187
      %p189 = pneg %p188
      // Predicated region
      $region25: #{tpu_custom_call.1} parent=5 // pred_check
        _
      $region26: #{tpu_custom_call.1} parent=5 // pred_check_branch
        %191 = sbr.rel (%p188) target = $region28
      $region27: #{tpu_custom_call.1} parent=5 // pred_region
        %s192 = ssub.s32 %s17, 1
        %s193 = sand.u32 %s48, 1
        %s194 = scalar_lea.sflag [#allocation3], %s193
        %s195 = sand.u32 %s48, 1
        %s196 = smul.addr %s195, 32
        %s197 = scalar_lea.vmem [#allocation2], %s196
        // Predicated region
        $region29: #{tpu_custom_call.1} parent=27 // pred_check
          %p198 = pneg %p61
        $region30: #{tpu_custom_call.1} parent=27 // pred_check_branch
          %200 = sbr.rel (%p198) target = $region32
        $region31: #{tpu_custom_call.1} parent=27 // pred_region
          %201 = dma.done %s194, 512
        $region32: #{tpu_custom_call.1} parent=27 // pred_fallthru
          _
        %s202 = sand.u32 %s80, 1
        %s203 = scalar_lea.sflag [#allocation6], %s202
        %s204 = sand.u32 %s80, 1
        %s205 = smul.addr %s204, 32
        %s206 = scalar_lea.vmem [#allocation5], %s205
        // Predicated region
        $region33: #{tpu_custom_call.1} parent=27 // pred_check
          %p207 = pneg %p93
        $region34: #{tpu_custom_call.1} parent=27 // pred_check_branch
          %209 = sbr.rel (%p207) target = $region36
        $region35: #{tpu_custom_call.1} parent=27 // pred_region
          %210 = dma.done %s203, 512
        $region36: #{tpu_custom_call.1} parent=27 // pred_fallthru
          _
        %s211 = sand.u32 %s48, 1
        %s212 = scalar_lea.sflag [#allocation3], %s211
        %s213 = sand.u32 %s48, 1
        %s214 = smul.addr %s213, 32
        %s215 = scalar_lea.vmem [#allocation2], %s214
        %p216 = pneg %p61
        %p217 = pneg %p58
        %s218 = sand.u32 %s80, 1
        %s219 = scalar_lea.sflag [#allocation6], %s218
        %s220 = sand.u32 %s80, 1
        %s221 = smul.addr %s220, 32
        %s222 = scalar_lea.vmem [#allocation5], %s221
        %p223 = pneg %p93
        %p224 = pneg %p90
        %p225 = pneg %p119
        %p226 = pneg %p116
        %s227 = sand.u32 %s106, 1
        %s228 = scalar_lea.sflag [#allocation4], %s227
        %s229 = sand.u32 %s106, 1
        %s230 = smul.addr %s229, 32
        %s231 = scalar_lea.vmem [#allocation7], %s230
        %s232 = sadd.s32 %s26, %s27
        %p233 = scmp.lt.s32.totalorder %s232, 0
        %s234 = scalar_select %p233, %s232, 0
        %s235 = smul.u32 4, %s234
        %s236 = sadd.s32 %s26, %s27
        %p237 = scmp.lt.s32.totalorder %s236, 0
        %s238 = scalar_select %p237, %s236, 0
        %s239 = smul.u32 4, %s238
        %p240 = scmp.eq.s32.totalorder %s27, 0
        // Predicated region
        $region37: #{tpu_custom_call.1} parent=27 // pred_check
          %p241 = pneg %p240
        $region38: #{tpu_custom_call.1} parent=27 // pred_check_branch
          %243 = sbr.rel (%p241) target = $region40
        $region39: #{tpu_custom_call.1} parent=27 // pred_region
          %244 = vst [vmem:[%s231] sm:$0xff] 0.0
          %245 = vst [vmem:[%s231 + $0x8] sm:$0xff] 0.0
          %246 = vst [vmem:[%s231 + $0x10] sm:$0xff] 0.0
          %247 = vst [vmem:[%s231 + $0x18] sm:$0xff] 0.0
        $region40: #{tpu_custom_call.1} parent=27 // pred_fallthru
          _
        %v248 = vld [vmem:[%s197] sm:$0xff]
        %v249 = vld [vmem:[%s197 + $0x8] sm:$0xff]
        %v250 = vld [vmem:[%s197 + $0x10] sm:$0xff]
        %v251 = vld [vmem:[%s197 + $0x18] sm:$0xff]
        %v252 = vld [vmem:[%s206] sm:$0xff]
        %v253 = vld [vmem:[%s206 + $0x8] sm:$0xff]
        %v254 = vld [vmem:[%s206 + $0x10] sm:$0xff]
        %v255 = vld [vmem:[%s206 + $0x18] sm:$0xff]
        %v256 = vand.u32 2147483647, %v252
        %v257 = vand.u32 2147483647, %v253
        %v258 = vand.u32 2147483647, %v254
        %v259 = vand.u32 2147483647, %v255
        %v260 = vsub.f32 %v252, %v248
        %v261 = vsub.f32 %v253, %v249
        %v262 = vsub.f32 %v254, %v250
        %v263 = vsub.f32 %v255, %v251
        %v264 = vand.u32 2147483647, %v260
        %v265 = vand.u32 2147483647, %v261
        %v266 = vand.u32 2147483647, %v262
        %v267 = vand.u32 2147483647, %v263
        %v268 = vrcp.pop %v256
        %v269 = vrcp.pop %v257
        %v270 = vrcp.pop %v258
        %v271 = vrcp.pop %v259
        %v272 = vmul.f32 %v256, %v268
        %v273 = vmul.f32 %v257, %v269
        %v274 = vmul.f32 %v258, %v270
        %v275 = vmul.f32 %v259, %v271
        %v276 = vsub.f32 2.0, %v272
        %v277 = vsub.f32 2.0, %v273
        %v278 = vsub.f32 2.0, %v274
        %v279 = vsub.f32 2.0, %v275
        %v280 = vmul.f32 %v268, %v276
        %v281 = vmul.f32 %v269, %v277
        %v282 = vmul.f32 %v270, %v278
        %v283 = vmul.f32 %v271, %v279
        %s284 = sadd.s32 %s26, %s27
        %s285 = smul.u32 %s284, 32
        %v286 = vlaneseq
        %v287 = vshrl.u32 %v286, 7
        %v288 = vadd.s32 %v287, 8
        %v289 = vadd.s32 %v287, 16
        %v290 = vadd.s32 %v287, 24
        %v291 = vstv %s285
        %v292 = vadd.s32 %v291, %v287
        %v293 = vadd.s32 %v291, %v288
        %v294 = vadd.s32 %v291, %v289
        %v295 = vadd.s32 %v291, %v290
        %vm296 = vcmp.lt.s32.totalorder %v292, 32
        %vm297 = vcmp.lt.s32.totalorder %v293, 32
        %vm298 = vcmp.lt.s32.totalorder %v294, 32
        %vm299 = vcmp.lt.s32.totalorder %v295, 32
        %vm300 = vcmp.gt.f32.partialorder %v256, 0.0
        %vm301 = vcmp.gt.f32.partialorder %v257, 0.0
        %vm302 = vcmp.gt.f32.partialorder %v258, 0.0
        %vm303 = vcmp.gt.f32.partialorder %v259, 0.0
        %vm304 = vmand %vm296, %vm300
        %vm305 = vmand %vm297, %vm301
        %vm306 = vmand %vm298, %vm302
        %vm307 = vmand %vm299, %vm303
        %vm308 = vweird.f32 %v280
        %vm309 = vweird.f32 %v281
        %vm310 = vweird.f32 %v282
        %vm311 = vweird.f32 %v283
        %vm312 = vmxor %vm308, 1
        %vm313 = vmxor %vm309, 1
        %vm314 = vmxor %vm310, 1
        %vm315 = vmxor %vm311, 1
        %vm316 = vmand %vm304, %vm312
        %vm317 = vmand %vm305, %vm313
        %vm318 = vmand %vm306, %vm314
        %vm319 = vmand %vm307, %vm315
        %v320 = vmul.f32 %v264, %v280
        %v321 = vmul.f32 %v265, %v281
        %v322 = vmul.f32 %v266, %v282
        %v323 = vmul.f32 %v267, %v283
        %v324 = vsel %vm316, %v320, 0.0
        %v325 = vsel %vm317, %v321, 0.0
        %v326 = vsel %vm318, %v322, 0.0
        %v327 = vsel %vm319, %v323, 0.0
        %v328 = vadd.f32 %v324, 0.0
        %v329 = vadd.f32 %v325, 0.0
        %v330 = vadd.f32 %v326, 0.0
        %v331 = vadd.f32 %v327, 0.0
        %v332 = vld [vmem:[%s231] sm:$0xff]
        %v333 = vld [vmem:[%s231 + $0x8] sm:$0xff]
        %v334 = vld [vmem:[%s231 + $0x10] sm:$0xff]
        %v335 = vld [vmem:[%s231 + $0x18] sm:$0xff]
        %v336 = vadd.f32 %v332, %v328
        %v337 = vadd.f32 %v333, %v329
        %v338 = vadd.f32 %v334, %v330
        %v339 = vadd.f32 %v335, %v331
        %340 = vst [vmem:[%s231] sm:$0xff] %v336
        %341 = vst [vmem:[%s231 + $0x8] sm:$0xff] %v337
        %342 = vst [vmem:[%s231 + $0x10] sm:$0xff] %v338
        %343 = vst [vmem:[%s231 + $0x18] sm:$0xff] %v339
        %s344 = sand.u32 %s106, 1
        %s345 = scalar_lea.sflag [#allocation4], %s344
        %s346 = sand.u32 %s106, 1
        %s347 = smul.addr %s346, 32
        %s348 = scalar_lea.vmem [#allocation7], %s347
        // Predicated region
        $region41: #{tpu_custom_call.1} parent=27 // pred_check
          %p349 = pneg %p116
        $region42: #{tpu_custom_call.1} parent=27 // pred_check_branch
          %351 = sbr.rel (%p349) target = $region44
        $region43: #{tpu_custom_call.1} parent=27 // pred_region
          %s353 = ssub.s32 512, 512
          %354 = vsyncadd %s345, %s353
          %s355 = smul.addr %s26, 4
          %s356 = smul.addr %s355, 128
          %s357 = scalar_lea.hbm %s2, %s356
          %s358 = sshll.u32 %s348, 4
          %s359 = int_to_ptr.vmem [resolvable:$true] %s358
          %364 = dma.vmem_to_hbm [thread:$0]  %s359, 512, %s357, %s345, 128, 128, 8
        $region44: #{tpu_custom_call.1} parent=27 // pred_fallthru
          _
      $region28: #{tpu_custom_call.1} parent=5 // pred_fallthru
        _
      %p365 = scmp.le.s32.totalorder 2, %s17
      // Predicated region
      $region45: #{tpu_custom_call.1} parent=5 // pred_check
        %p366 = pneg %p365
      $region46: #{tpu_custom_call.1} parent=5 // pred_check_branch
        %368 = sbr.rel (%p366) target = $region48
      $region47: #{tpu_custom_call.1} parent=5 // pred_region
        %s369 = ssub.s32 %s17, 2
        // Predicated region
        $region49: #{tpu_custom_call.1} parent=47 // pred_check
          %p370 = pneg %p122
        $region50: #{tpu_custom_call.1} parent=47 // pred_check_branch
          %372 = sbr.rel (%p370) target = $region52
        $region51: #{tpu_custom_call.1} parent=47 // pred_region
          %s373 = sand.u32 %s107, 1
          %s374 = scalar_lea.sflag [#allocation4], %s373
          %s375 = sand.u32 %s107, 1
          %s376 = smul.addr %s375, 32
          %s377 = scalar_lea.vmem [#allocation7], %s376
          %378 = dma.done %s374, 512
        $region52: #{tpu_custom_call.1} parent=47 // pred_fallthru
          _
      $region48: #{tpu_custom_call.1} parent=5 // pred_fallthru
        _
    $region6: #{tpu_custom_call.1} parent=1 // loop_footer
      %s21 = sadd.s32 1, %s17
    $region7: #{tpu_custom_call.1} parent=1 // loop_footer_branch
      %16 = sbr.rel target = $region3
    $region8: #{tpu_custom_call.1} parent=1 // loop_exit
      _
    %379 = vsyncpa [#allocation3], 1
    %s380 = scalar_lea.sflag [#allocation3], 1
    %381 = vsyncpa %s380, 1
    %382 = vsyncpa [#allocation6], 1
    %s383 = scalar_lea.sflag [#allocation6], 1
    %384 = vsyncpa %s383, 1
    %385 = vsyncpa [#allocation4], 1
    %s386 = scalar_lea.sflag [#allocation4], 1
    %387 = vsyncpa %s386, 1

</llo_original>
